<compile_context>
chip_gen: v7x
topology: tpu7x:2x2x1
jax: 0.10.0
libtpu: 0.0.40
codegen_flags: <defaults>
</compile_context>

<pallas_src>
import jax
import jax.numpy as jnp
import numpy as np
from jax.experimental import pallas as pl
from jax.experimental.pallas import tpu as pltpu


def split_and_sum_kernel(x1_ref, x2_ref, w_ref, b_ref, ws1_ref, ws2_ref,
                         out_ref):
    """Fused forward pass for one batch tile.

    x1_ref  : [TB, 784]  flattened image-1 rows of this tile
    x2_ref  : [TB, 784]  flattened image-2 rows of this tile
    w_ref   : [784, 10]  shared linear weight (transposed vs PyTorch)
    b_ref   : [1, 10]    shared linear bias
    ws1_ref : [10, 19]   sum-layer weight rows acting on img1 logits
    ws2_ref : [10, 19]   sum-layer weight rows acting on img2 logits
    out_ref : [TB, 19]   logits over digit sums 0..18
    """
    w = w_ref[...]
    b = b_ref[...]

    # Shared weak linear + ReLU on each image (f32 MXU accumulation).
    h1 = jnp.maximum(
        jnp.dot(x1_ref[...], w, preferred_element_type=jnp.float32) + b, 0.0)
    h2 = jnp.maximum(
        jnp.dot(x2_ref[...], w, preferred_element_type=jnp.float32) + b, 0.0)

    # cat([h1, h2], dim=1) @ Wsum  ==  h1 @ Wsum[:10] + h2 @ Wsum[10:]
    o = jnp.dot(h1, ws1_ref[...], preferred_element_type=jnp.float32) + \
        jnp.dot(h2, ws2_ref[...], preferred_element_type=jnp.float32)
    out_ref[...] = o.astype(out_ref.dtype)


def _round_up(x, m):
    return (x + m - 1) // m * m


def split_and_sum(img1, img2, w, b, wsum, *, block_b=2048):
    """img1, img2: [B, 1, 28, 28] (NCHW). Returns [B, 19] float32 logits.

    w    : [784, 10] shared linear weight (transposed vs. PyTorch [10, 784])
    b    : [10]      shared linear bias
    wsum : [20, 19]  fixed sum-layer weight (transposed vs. PyTorch [19, 20])
    """
    B = img1.shape[0]
    K = 28 * 28

    # nn.Flatten: contiguous reshape only (no data movement, no padding).
    x1 = img1.reshape(B, K).astype(jnp.float32)
    x2 = img2.reshape(B, K).astype(jnp.float32)

    # Tile size: multiple of 8 sublanes; cap so nb >= 4 for large B (v7x
    # megacore + live double-buffering).  Ragged last tile is handled by
    # Pallas's partial-block masking -> no batch padding in HBM.
    block_b = _round_up(max(int(block_b), 8), 8)
    TB = min(block_b, max(8, _round_up(pl.cdiv(B, 4), 8)))
    nb = pl.cdiv(B, TB)

    w32 = w.astype(jnp.float32)                     # [784, 10] resident
    b2d = b.reshape(1, 10).astype(jnp.float32)      # [1, 10]   resident
    ws1 = wsum[:10].astype(jnp.float32)             # [10, 19]  resident
    ws2 = wsum[10:].astype(jnp.float32)             # [10, 19]  resident

    out = pl.pallas_call(
        split_and_sum_kernel,
        out_shape=jax.ShapeDtypeStruct((B, 19), jnp.float32),
        grid_spec=pltpu.PrefetchScalarGridSpec(
            num_scalar_prefetch=0,
            grid=(nb,),
            in_specs=[
                # image tiles: new block each grid step (auto double-buffered)
                pl.BlockSpec((TB, K), lambda i: (i, 0)),
                pl.BlockSpec((TB, K), lambda i: (i, 0)),
                # weights: constant index_map -> resident in VMEM across tiles
                pl.BlockSpec((K, 10), lambda i: (0, 0)),
                pl.BlockSpec((1, 10), lambda i: (0, 0)),
                pl.BlockSpec((10, 19), lambda i: (0, 0)),
                pl.BlockSpec((10, 19), lambda i: (0, 0)),
            ],
            out_specs=pl.BlockSpec((TB, 19), lambda i: (i, 0)),
        ),
        compiler_params=pltpu.CompilerParams(
            dimension_semantics=("parallel",),   # megacore sharding on v7x
            vmem_limit_bytes=48 * 1024 * 1024,   # safe on v5e/v6e/v7x
        ),
    )(x1, x2, w32, b2d, ws1, ws2)
    return out


def make_params():
    # Deterministic synthetic init for the shared weak linear layer.
    k1, k2 = jax.random.split(jax.random.PRNGKey(42))
    w = jax.random.normal(k1, (28 * 28, 10), dtype=jnp.float32) * 0.02
    b = jax.random.normal(k2, (10,), dtype=jnp.float32) * 0.01

    # Fixed sum-layer weights: weights[i + j, i] = 1, weights[i + j, j + 10] = 1
    wsum_np = np.zeros((19, 20), dtype=np.float32)
    for i in range(10):
        for j in range(10):
            wsum_np[i + j, i] = 1.0
            wsum_np[i + j, j + 10] = 1.0
    wsum = jnp.asarray(wsum_np.T)  # [20, 19] for x @ W layout
    return w, b, wsum


def reference(img1, img2, w, b, wsum):
    B = img1.shape[0]
    x1 = img1.reshape(B, -1)
    x2 = img2.reshape(B, -1)
    h1 = jnp.maximum(x1 @ w + b, 0.0)
    h2 = jnp.maximum(x2 @ w + b, 0.0)
    return jnp.concatenate([h1, h2], axis=1) @ wsum


if __name__ == "__main__":
    w, b, wsum = make_params()
    key = jax.random.PRNGKey(0)

    # Test 1: small batch, single (partial) tile.
    k1, k2 = jax.random.split(key)
    B = 4
    img1 = jax.random.normal(k1, (B, 1, 28, 28), dtype=jnp.float32)
    img2 = jax.random.normal(k2, (B, 1, 28, 28), dtype=jnp.float32)
    out = jax.block_until_ready(split_and_sum(img1, img2, w, b, wsum))
    ref = reference(img1, img2, w, b, wsum)
    assert out.shape == (B, 19)
    np.testing.assert_allclose(np.asarray(out), np.asarray(ref),
                               rtol=1e-5, atol=1e-5)

    # Test 2: ragged batch with multiple grid tiles (exercises pipelined batch
    # tiling, resident weights, and masked partial last tile).
    k3, k4 = jax.random.split(k2)
    B2 = 20
    img1b = jax.random.normal(k3, (B2, 1, 28, 28), dtype=jnp.float32)
    img2b = jax.random.normal(k4, (B2, 1, 28, 28), dtype=jnp.float32)
    out2 = jax.block_until_ready(
        split_and_sum(img1b, img2b, w, b, wsum, block_b=8))
    ref2 = reference(img1b, img2b, w, b, wsum)
    assert out2.shape == (B2, 19)
    np.testing.assert_allclose(np.asarray(out2), np.asarray(ref2),
                               rtol=1e-5, atol=1e-5)

    print("KERNEL_OK")
</pallas_src>

<mosaic_0001>
module attributes {stable_mosaic.version = 11 : i64} {
  func.func @split_and_sum_kernel(%arg0: i32, %arg1: memref<8x784xf32, #tpu.memory_space<vmem>>, %arg2: memref<8x784xf32, #tpu.memory_space<vmem>>, %arg3: memref<784x10xf32, #tpu.memory_space<vmem>>, %arg4: memref<1x10xf32, #tpu.memory_space<vmem>>, %arg5: memref<10x19xf32, #tpu.memory_space<vmem>>, %arg6: memref<10x19xf32, #tpu.memory_space<vmem>>, %arg7: memref<8x19xf32, #tpu.memory_space<vmem>>) attributes {dimension_semantics = [#tpu.dimension_semantics<parallel>], iteration_bounds = array<i64: 1>, scalar_prefetch = 0 : i64, scratch_operands = 0 : i64, tpu.core_type = #tpu.core_type<tc>, window_params = [{transform_indices = @transform_0, window_bounds = array<i64: 8, 784>}, {transform_indices = @transform_1, window_bounds = array<i64: 8, 784>}, {pipeline_mode = #tpu.pipeline_mode<synchronous>, transform_indices = @transform_2, window_bounds = array<i64: 784, 10>}, {pipeline_mode = #tpu.pipeline_mode<synchronous>, transform_indices = @transform_3, window_bounds = array<i64: 1, 10>}, {pipeline_mode = #tpu.pipeline_mode<synchronous>, transform_indices = @transform_4, window_bounds = array<i64: 10, 19>}, {pipeline_mode = #tpu.pipeline_mode<synchronous>, transform_indices = @transform_5, window_bounds = array<i64: 10, 19>}, {transform_indices = @transform_6, window_bounds = array<i64: 8, 19>}]} {
    %c0 = arith.constant 0 : index
    %c0_0 = arith.constant 0 : index
    %0 = vector.load %arg3[%c0, %c0_0] : memref<784x10xf32, #tpu.memory_space<vmem>>, vector<784x10xf32>
    %c0_1 = arith.constant 0 : index
    %c0_2 = arith.constant 0 : index
    %1 = vector.load %arg4[%c0_1, %c0_2] : memref<1x10xf32, #tpu.memory_space<vmem>>, vector<1x10xf32>
    %c0_3 = arith.constant 0 : index
    %c0_4 = arith.constant 0 : index
    %2 = vector.load %arg1[%c0_3, %c0_4] : memref<8x784xf32, #tpu.memory_space<vmem>>, vector<8x784xf32>
    %cst = arith.constant dense<0.000000e+00> : vector<8x10xf32>
    %3 = tpu.matmul %2, %0, %cst {dimension_numbers = #tpu.dot_dimension_numbers<[1], [0], [0], [1], [0, 0, 1, 1], [], []>} : vector<8x784xf32>, vector<784x10xf32>, vector<8x10xf32> -> vector<8x10xf32>
    %4 = vector.broadcast %1 : vector<1x10xf32> to vector<8x10xf32>
    %5 = arith.addf %3, %4 : vector<8x10xf32>
    %cst_5 = arith.constant 0.000000e+00 : f32
    %6 = vector.broadcast %cst_5 : f32 to vector<8x10xf32>
    %7 = arith.maximumf %5, %6 : vector<8x10xf32>
    %c0_6 = arith.constant 0 : index
    %c0_7 = arith.constant 0 : index
    %8 = vector.load %arg2[%c0_6, %c0_7] : memref<8x784xf32, #tpu.memory_space<vmem>>, vector<8x784xf32>
    %cst_8 = arith.constant dense<0.000000e+00> : vector<8x10xf32>
    %9 = tpu.matmul %8, %0, %cst_8 {dimension_numbers = #tpu.dot_dimension_numbers<[1], [0], [0], [1], [0, 0, 1, 1], [], []>} : vector<8x784xf32>, vector<784x10xf32>, vector<8x10xf32> -> vector<8x10xf32>
    %10 = vector.broadcast %1 : vector<1x10xf32> to vector<8x10xf32>
    %11 = arith.addf %9, %10 : vector<8x10xf32>
    %cst_9 = arith.constant 0.000000e+00 : f32
    %12 = vector.broadcast %cst_9 : f32 to vector<8x10xf32>
    %13 = arith.maximumf %11, %12 : vector<8x10xf32>
    %c0_10 = arith.constant 0 : index
    %c0_11 = arith.constant 0 : index
    %14 = vector.load %arg5[%c0_10, %c0_11] : memref<10x19xf32, #tpu.memory_space<vmem>>, vector<10x19xf32>
    %cst_12 = arith.constant dense<0.000000e+00> : vector<8x19xf32>
    %15 = tpu.matmul %7, %14, %cst_12 {dimension_numbers = #tpu.dot_dimension_numbers<[1], [0], [0], [1], [0, 0, 1, 1], [], []>} : vector<8x10xf32>, vector<10x19xf32>, vector<8x19xf32> -> vector<8x19xf32>
    %c0_13 = arith.constant 0 : index
    %c0_14 = arith.constant 0 : index
    %16 = vector.load %arg6[%c0_13, %c0_14] : memref<10x19xf32, #tpu.memory_space<vmem>>, vector<10x19xf32>
    %cst_15 = arith.constant dense<0.000000e+00> : vector<8x19xf32>
    %17 = tpu.matmul %13, %16, %cst_15 {dimension_numbers = #tpu.dot_dimension_numbers<[1], [0], [0], [1], [0, 0, 1, 1], [], []>} : vector<8x10xf32>, vector<10x19xf32>, vector<8x19xf32> -> vector<8x19xf32>
    %18 = arith.addf %15, %17 : vector<8x19xf32>
    %c0_16 = arith.constant 0 : index
    %c0_17 = arith.constant 0 : index
    %19 = vector.load %arg7[%c0_16, %c0_17] : memref<8x19xf32, #tpu.memory_space<vmem>>, vector<8x19xf32>
    tpu.vector_store %arg7[%c0_16, %c0_17], %18 {strides = array<i32>} : memref<8x19xf32, #tpu.memory_space<vmem>>, vector<8x19xf32>,
    return
  }
  func.func @transform_0(%arg0: i32) -> (i32, i32) {
    %c0_i32 = arith.constant 0 : i32
    %c0_i32_0 = arith.constant 0 : i32
    return %arg0, %c0_i32 : i32, i32
  }
  func.func @transform_1(%arg0: i32) -> (i32, i32) {
    %c0_i32 = arith.constant 0 : i32
    %c0_i32_0 = arith.constant 0 : i32
    return %arg0, %c0_i32 : i32, i32
  }
  func.func @transform_2(%arg0: i32) -> (i32, i32) {
    %c0_i32 = arith.constant 0 : i32
    %c0_i32_0 = arith.constant 0 : i32
    %c0_i32_1 = arith.constant 0 : i32
    return %c0_i32, %c0_i32_0 : i32, i32
  }
  func.func @transform_3(%arg0: i32) -> (i32, i32) {
    %c0_i32 = arith.constant 0 : i32
    %c0_i32_0 = arith.constant 0 : i32
    %c0_i32_1 = arith.constant 0 : i32
    return %c0_i32, %c0_i32_0 : i32, i32
  }
  func.func @transform_4(%arg0: i32) -> (i32, i32) {
    %c0_i32 = arith.constant 0 : i32
    %c0_i32_0 = arith.constant 0 : i32
    %c0_i32_1 = arith.constant 0 : i32
    return %c0_i32, %c0_i32_0 : i32, i32
  }
  func.func @transform_5(%arg0: i32) -> (i32, i32) {
    %c0_i32 = arith.constant 0 : i32
    %c0_i32_0 = arith.constant 0 : i32
    %c0_i32_1 = arith.constant 0 : i32
    return %c0_i32, %c0_i32_0 : i32, i32
  }
  func.func @transform_6(%arg0: i32) -> (i32, i32) {
    %c0_i32 = arith.constant 0 : i32
    %c0_i32_0 = arith.constant 0 : i32
    return %arg0, %c0_i32 : i32, i32
  }
}

</mosaic_0001>

<llo_original>
// kernel: tpu_custom_call.1
$region0: #{tpu_custom_call.1}
  #allocation0 [shape = 'u32[]', space=smem, size = 0x4, offset = 0x4, fixed_abs, tag = 'smem constant byte address 0x4 - core index']
  #allocation1 [shape = 'u32[144,128]{1,0:T(1,128)}', space=vmem, size = 0x12000, scoped, tag = 'internal scratch']
  %s0 = inlined_call_operand.vmem [shape: f32[4,784], index: 0, kind: input, shape index: {}]
  %s1 = inlined_call_operand.vmem [shape: f32[4,784], index: 1, kind: input, shape index: {}]
  %s2 = inlined_call_operand.vmem [shape: f32[784,10], index: 2, kind: input, shape index: {}]
  %s3 = inlined_call_operand.vmem [shape: f32[1,10], index: 3, kind: input, shape index: {}]
  %s4 = inlined_call_operand.vmem [shape: f32[10,19], index: 4, kind: input, shape index: {}]
  %s5 = inlined_call_operand.vmem [shape: f32[10,19], index: 5, kind: input, shape index: {}]
  %s6 = inlined_call_operand.hbm [shape: f32[4,19], index: 6, kind: output, shape index: {}]
  %s7 = sld [smem:[#allocation0]]
  $region34: #{tpu_custom_call.1} parent=0
    _
  %s9 = ssub.s32 1, %s7
  %s10 = scalar_select 0, %s9, %s7
  $region1: #{tpu_custom_call.1} parent=0
    #allocation2 [shape = 'u8[4096]{0}', space=vmem, size = 0x1000, scoped, tag = 'output window, operand 0, single buffered']
    #allocation3 [shape = 's32[1]{0}', space=sflag, size = 0x4, scoped, tag = 'scoped memory for tpu_custom_call.1']
    %11 = vsyncpa [#allocation3], 0
    // Predicated region
    $region2: #{tpu_custom_call.1} parent=1 // pred_check
      _
    $region3: #{tpu_custom_call.1} parent=1 // pred_check_branch
      %13 = sbr.rel (0) target = $region5
    $region4: #{tpu_custom_call.1} parent=1 // pred_region
      _
    $region5: #{tpu_custom_call.1} parent=1 // pred_fallthru
      _
    // Predicated region
    $region6: #{tpu_custom_call.1} parent=1 // pred_check
      _
    $region7: #{tpu_custom_call.1} parent=1 // pred_check_branch
      %15 = sbr.rel (0) target = $region9
    $region8: #{tpu_custom_call.1} parent=1 // pred_region
      _
    $region9: #{tpu_custom_call.1} parent=1 // pred_fallthru
      _
    // Predicated region
    $region10: #{tpu_custom_call.1} parent=1 // pred_check
      _
    $region11: #{tpu_custom_call.1} parent=1 // pred_check_branch
      %17 = sbr.rel (0) target = $region13
    $region12: #{tpu_custom_call.1} parent=1 // pred_region
      _
    $region13: #{tpu_custom_call.1} parent=1 // pred_fallthru
      _
    // Predicated region
    $region14: #{tpu_custom_call.1} parent=1 // pred_check
      _
    $region15: #{tpu_custom_call.1} parent=1 // pred_check_branch
      %19 = sbr.rel (0) target = $region17
    $region16: #{tpu_custom_call.1} parent=1 // pred_region
      _
    $region17: #{tpu_custom_call.1} parent=1 // pred_fallthru
      _
    // Predicated region
    $region18: #{tpu_custom_call.1} parent=1 // pred_check
      _
    $region19: #{tpu_custom_call.1} parent=1 // pred_check_branch
      %21 = sbr.rel (0) target = $region21
    $region20: #{tpu_custom_call.1} parent=1 // pred_region
      _
    $region21: #{tpu_custom_call.1} parent=1 // pred_fallthru
      _
    // Predicated region
    $region22: #{tpu_custom_call.1} parent=1 // pred_check
      _
    $region23: #{tpu_custom_call.1} parent=1 // pred_check_branch
      %23 = sbr.rel (0) target = $region25
    $region24: #{tpu_custom_call.1} parent=1 // pred_region
      _
    $region25: #{tpu_custom_call.1} parent=1 // pred_fallthru
      _
    %v24 = vld [vmem:[%s2] sm:$0xff]
    %v25 = vld [vmem:[%s2 + $0x8] sm:$0xff]
    %v26 = vld [vmem:[%s2 + $0x10] sm:$0xff]
    %v27 = vld [vmem:[%s2 + $0x18] sm:$0xff]
    %v28 = vld [vmem:[%s2 + $0x20] sm:$0xff]
    %v29 = vld [vmem:[%s2 + $0x28] sm:$0xff]
    %v30 = vld [vmem:[%s2 + $0x30] sm:$0xff]
    %v31 = vld [vmem:[%s2 + $0x38] sm:$0xff]
    %v32 = vld [vmem:[%s2 + $0x40] sm:$0xff]
    %v33 = vld [vmem:[%s2 + $0x48] sm:$0xff]
    %v34 = vld [vmem:[%s2 + $0x50] sm:$0xff]
    %v35 = vld [vmem:[%s2 + $0x58] sm:$0xff]
    %v36 = vld [vmem:[%s2 + $0x60] sm:$0xff]
    %v37 = vld [vmem:[%s2 + $0x68] sm:$0xff]
    %v38 = vld [vmem:[%s2 + $0x70] sm:$0xff]
    %v39 = vld [vmem:[%s2 + $0x78] sm:$0xff]
    %v40 = vld [vmem:[%s2 + $0x80] sm:$0xff]
    %v41 = vld [vmem:[%s2 + $0x88] sm:$0xff]
    %v42 = vld [vmem:[%s2 + $0x90] sm:$0xff]
    %v43 = vld [vmem:[%s2 + $0x98] sm:$0xff]
    %v44 = vld [vmem:[%s2 + $0xa0] sm:$0xff]
    %v45 = vld [vmem:[%s2 + $0xa8] sm:$0xff]
    %v46 = vld [vmem:[%s2 + $0xb0] sm:$0xff]
    %v47 = vld [vmem:[%s2 + $0xb8] sm:$0xff]
    %v48 = vld [vmem:[%s2 + $0xc0] sm:$0xff]
    %v49 = vld [vmem:[%s2 + $0xc8] sm:$0xff]
    %v50 = vld [vmem:[%s2 + $0xd0] sm:$0xff]
    %v51 = vld [vmem:[%s2 + $0xd8] sm:$0xff]
    %v52 = vld [vmem:[%s2 + $0xe0] sm:$0xff]
    %v53 = vld [vmem:[%s2 + $0xe8] sm:$0xff]
    %v54 = vld [vmem:[%s2 + $0xf0] sm:$0xff]
    %v55 = vld [vmem:[%s2 + $0xf8] sm:$0xff]
    %v56 = vld [vmem:[%s2 + $0x100] sm:$0xff]
    %v57 = vld [vmem:[%s2 + $0x108] sm:$0xff]
    %v58 = vld [vmem:[%s2 + $0x110] sm:$0xff]
    %v59 = vld [vmem:[%s2 + $0x118] sm:$0xff]
    %v60 = vld [vmem:[%s2 + $0x120] sm:$0xff]
    %v61 = vld [vmem:[%s2 + $0x128] sm:$0xff]
    %v62 = vld [vmem:[%s2 + $0x130] sm:$0xff]
    %v63 = vld [vmem:[%s2 + $0x138] sm:$0xff]
    %v64 = vld [vmem:[%s2 + $0x140] sm:$0xff]
    %v65 = vld [vmem:[%s2 + $0x148] sm:$0xff]
    %v66 = vld [vmem:[%s2 + $0x150] sm:$0xff]
    %v67 = vld [vmem:[%s2 + $0x158] sm:$0xff]
    %v68 = vld [vmem:[%s2 + $0x160] sm:$0xff]
    %v69 = vld [vmem:[%s2 + $0x168] sm:$0xff]
    %v70 = vld [vmem:[%s2 + $0x170] sm:$0xff]
    %v71 = vld [vmem:[%s2 + $0x178] sm:$0xff]
    %v72 = vld [vmem:[%s2 + $0x180] sm:$0xff]
    %v73 = vld [vmem:[%s2 + $0x188] sm:$0xff]
    %v74 = vld [vmem:[%s2 + $0x190] sm:$0xff]
    %v75 = vld [vmem:[%s2 + $0x198] sm:$0xff]
    %v76 = vld [vmem:[%s2 + $0x1a0] sm:$0xff]
    %v77 = vld [vmem:[%s2 + $0x1a8] sm:$0xff]
    %v78 = vld [vmem:[%s2 + $0x1b0] sm:$0xff]
    %v79 = vld [vmem:[%s2 + $0x1b8] sm:$0xff]
    %v80 = vld [vmem:[%s2 + $0x1c0] sm:$0xff]
    %v81 = vld [vmem:[%s2 + $0x1c8] sm:$0xff]
    %v82 = vld [vmem:[%s2 + $0x1d0] sm:$0xff]
    %v83 = vld [vmem:[%s2 + $0x1d8] sm:$0xff]
    %v84 = vld [vmem:[%s2 + $0x1e0] sm:$0xff]
    %v85 = vld [vmem:[%s2 + $0x1e8] sm:$0xff]
    %v86 = vld [vmem:[%s2 + $0x1f0] sm:$0xff]
    %v87 = vld [vmem:[%s2 + $0x1f8] sm:$0xff]
    %v88 = vld [vmem:[%s2 + $0x200] sm:$0xff]
    %v89 = vld [vmem:[%s2 + $0x208] sm:$0xff]
    %v90 = vld [vmem:[%s2 + $0x210] sm:$0xff]
    %v91 = vld [vmem:[%s2 + $0x218] sm:$0xff]
    %v92 = vld [vmem:[%s2 + $0x220] sm:$0xff]
    %v93 = vld [vmem:[%s2 + $0x228] sm:$0xff]
    %v94 = vld [vmem:[%s2 + $0x230] sm:$0xff]
    %v95 = vld [vmem:[%s2 + $0x238] sm:$0xff]
    %v96 = vld [vmem:[%s2 + $0x240] sm:$0xff]
    %v97 = vld [vmem:[%s2 + $0x248] sm:$0xff]
    %v98 = vld [vmem:[%s2 + $0x250] sm:$0xff]
    %v99 = vld [vmem:[%s2 + $0x258] sm:$0xff]
    %v100 = vld [vmem:[%s2 + $0x260] sm:$0xff]
    %v101 = vld [vmem:[%s2 + $0x268] sm:$0xff]
    %v102 = vld [vmem:[%s2 + $0x270] sm:$0xff]
    %v103 = vld [vmem:[%s2 + $0x278] sm:$0xff]
    %v104 = vld [vmem:[%s2 + $0x280] sm:$0xff]
    %v105 = vld [vmem:[%s2 + $0x288] sm:$0xff]
    %v106 = vld [vmem:[%s2 + $0x290] sm:$0xff]
    %v107 = vld [vmem:[%s2 + $0x298] sm:$0xff]
    %v108 = vld [vmem:[%s2 + $0x2a0] sm:$0xff]
    %v109 = vld [vmem:[%s2 + $0x2a8] sm:$0xff]
    %v110 = vld [vmem:[%s2 + $0x2b0] sm:$0xff]
    %v111 = vld [vmem:[%s2 + $0x2b8] sm:$0xff]
    %v112 = vld [vmem:[%s2 + $0x2c0] sm:$0xff]
    %v113 = vld [vmem:[%s2 + $0x2c8] sm:$0xff]
    %v114 = vld [vmem:[%s2 + $0x2d0] sm:$0xff]
    %v115 = vld [vmem:[%s2 + $0x2d8] sm:$0xff]
    %v116 = vld [vmem:[%s2 + $0x2e0] sm:$0xff]
    %v117 = vld [vmem:[%s2 + $0x2e8] sm:$0xff]
    %v118 = vld [vmem:[%s2 + $0x2f0] sm:$0xff]
    %v119 = vld [vmem:[%s2 + $0x2f8] sm:$0xff]
    %v120 = vld [vmem:[%s2 + $0x300] sm:$0xff]
    %v121 = vld [vmem:[%s2 + $0x308] sm:$0xff]
    %v122 = vld [vmem:[%s3] sm:$0x1]
    %v123 = vld [vmem:[%s0] sm:$0xff]
    %v124 = vld [vmem:[%s0 + $0x8] sm:$0xff]
    %v125 = vld [vmem:[%s0 + $0x10] sm:$0xff]
    %v126 = vld [vmem:[%s0 + $0x18] sm:$0xf]
    %v127 = vld [vmem:[%s0 + $0x1c] sm:$0xff]
    %v128 = vld [vmem:[%s0 + $0x24] sm:$0xff]
    %v129 = vld [vmem:[%s0 + $0x2c] sm:$0xff]
    %v130 = vld [vmem:[%s0 + $0x34] sm:$0xf]
    %v132 = vlaneseq
    %v133 = vshrl.u32 %v132, 7
    %v134 = vsub.s32 0, %v133
    %v135 = vrot.slane %v122, %v134
    %v145 = vcombine.low %v123, %v127
    %v146 = vcombine.high %v123, %v127
    %v147 = vcombine.low %v124, %v128
    %v148 = vcombine.high %v124, %v128
    %v149 = vcombine.low %v125, %v129
    %v150 = vcombine.high %v125, %v129
    %v151 = vcombine.low %v126, %v130
    %vm158 = vcmask 130048
    %v159 = vsel %vm158, %v151, 0
    %161 = vmatprep.subr.mxu0 0.0
    %162 = vmatpush1.msra.mxu0 %v24
    %163 = vmatprep.subr.mxu0 0.0
    %164 = vmatpush1.msra.mxu0 %v25
    %165 = vmatprep.subr.mxu0 0.0
    %166 = vmatpush1.msra.mxu0 %v26
    %167 = vmatprep.subr.mxu0 0.0
    %168 = vmatpush1.msra.mxu0 %v27
    %169 = vmatprep.subr.mxu0 0.0
    %170 = vmatpush1.msra.mxu0 %v28
    %171 = vmatprep.subr.mxu0 0.0
    %172 = vmatpush1.msra.mxu0 %v29
    %173 = vmatprep.subr.mxu0 0.0
    %174 = vmatpush1.msra.mxu0 %v30
    %175 = vmatprep.subr.mxu0 0.0
    %176 = vmatpush1.msra.mxu0 %v31
    %177 = vmatprep.subr.mxu0 0.0
    %178 = vmatpush1.msra.mxu0 %v32
    %179 = vmatprep.subr.mxu0 0.0
    %180 = vmatpush1.msra.mxu0 %v33
    %181 = vmatprep.subr.mxu0 0.0
    %182 = vmatpush1.msra.mxu0 %v34
    %183 = vmatprep.subr.mxu0 0.0
    %184 = vmatpush1.msra.mxu0 %v35
    %185 = vmatprep.subr.mxu0 0.0
    %186 = vmatpush1.msra.mxu0 %v36
    %187 = vmatprep.subr.mxu0 0.0
    %188 = vmatpush1.msra.mxu0 %v37
    %189 = vmatprep.subr.mxu0 0.0
    %190 = vmatpush1.msra.mxu0 %v38
    %191 = vmatprep.subr.mxu0 0.0
    %192 = vmatpush1.msra.mxu0 %v39
    %193 = vmatprep.subr.mxu0 0.0
    %194 = vmatpush1.msra.mxu0 %v40
    %195 = vmatprep.subr.mxu0 0.0
    %196 = vmatpush1.msra.mxu0 %v41
    %197 = vmatprep.subr.mxu0 0.0
    %198 = vmatpush1.msra.mxu0 %v42
    %199 = vmatprep.subr.mxu0 0.0
    %200 = vmatpush1.msra.mxu0 %v43
    %201 = vmatprep.subr.mxu0 0.0
    %202 = vmatpush1.msra.mxu0 %v44
    %203 = vmatprep.subr.mxu0 0.0
    %204 = vmatpush1.msra.mxu0 %v45
    %205 = vmatprep.subr.mxu0 0.0
    %206 = vmatpush1.msra.mxu0 %v46
    %207 = vmatprep.subr.mxu0 0.0
    %208 = vmatpush1.msra.mxu0 %v47
    %209 = vmatprep.subr.mxu0 0.0
    %210 = vmatpush1.msra.mxu0 %v48
    %211 = vmatprep.subr.mxu0 0.0
    %212 = vmatpush1.msra.mxu0 %v49
    %213 = vmatprep.subr.mxu0 0.0
    %214 = vmatpush1.msra.mxu0 %v50
    %215 = vmatprep.subr.mxu0 0.0
    %216 = vmatpush1.msra.mxu0 %v51
    %217 = vmatprep.subr.mxu0 0.0
    %218 = vmatpush1.msra.mxu0 %v52
    %219 = vmatprep.subr.mxu0 0.0
    %220 = vmatpush1.msra.mxu0 %v53
    %221 = vmatprep.subr.mxu0 0.0
    %222 = vmatpush1.msra.mxu0 %v54
    %223 = vmatprep.subr.mxu0 0.0
    %224 = vmatpush1.msra.mxu0 %v55
    %225 = vmatprep.mubr.f32.mxu0 %v146
    %226 = vmatmul.mubr.f32.gmra.mrb[0].mxu0 %v145
    %v227 = vpop.f32.mrb[0].mxu0
    %v228 = vadd.f32 %v135, %v227
    %v229 = vpop.f32.mrb[0].mxu0
    %230 = vdwg.mxu0
    %231 = vmatprep.subr.mxu0 0.0
    %232 = vmatpush1.msra.mxu0 %v56
    %233 = vmatprep.subr.mxu0 0.0
    %234 = vmatpush1.msra.mxu0 %v57
    %235 = vmatprep.subr.mxu0 0.0
    %236 = vmatpush1.msra.mxu0 %v58
    %237 = vmatprep.subr.mxu0 0.0
    %238 = vmatpush1.msra.mxu0 %v59
    %239 = vmatprep.subr.mxu0 0.0
    %240 = vmatpush1.msra.mxu0 %v60
    %241 = vmatprep.subr.mxu0 0.0
    %242 = vmatpush1.msra.mxu0 %v61
    %243 = vmatprep.subr.mxu0 0.0
    %244 = vmatpush1.msra.mxu0 %v62
    %245 = vmatprep.subr.mxu0 0.0
    %246 = vmatpush1.msra.mxu0 %v63
    %247 = vmatprep.subr.mxu0 0.0
    %248 = vmatpush1.msra.mxu0 %v64
    %249 = vmatprep.subr.mxu0 0.0
    %250 = vmatpush1.msra.mxu0 %v65
    %251 = vmatprep.subr.mxu0 0.0
    %252 = vmatpush1.msra.mxu0 %v66
    %253 = vmatprep.subr.mxu0 0.0
    %254 = vmatpush1.msra.mxu0 %v67
    %255 = vmatprep.subr.mxu0 0.0
    %256 = vmatpush1.msra.mxu0 %v68
    %257 = vmatprep.subr.mxu0 0.0
    %258 = vmatpush1.msra.mxu0 %v69
    %259 = vmatprep.subr.mxu0 0.0
    %260 = vmatpush1.msra.mxu0 %v70
    %261 = vmatprep.subr.mxu0 0.0
    %262 = vmatpush1.msra.mxu0 %v71
    %263 = vmatprep.subr.mxu0 0.0
    %264 = vmatpush1.msra.mxu0 %v72
    %265 = vmatprep.subr.mxu0 0.0
    %266 = vmatpush1.msra.mxu0 %v73
    %267 = vmatprep.subr.mxu0 0.0
    %268 = vmatpush1.msra.mxu0 %v74
    %269 = vmatprep.subr.mxu0 0.0
    %270 = vmatpush1.msra.mxu0 %v75
    %271 = vmatprep.subr.mxu0 0.0
    %272 = vmatpush1.msra.mxu0 %v76
    %273 = vmatprep.subr.mxu0 0.0
    %274 = vmatpush1.msra.mxu0 %v77
    %275 = vmatprep.subr.mxu0 0.0
    %276 = vmatpush1.msra.mxu0 %v78
    %277 = vmatprep.subr.mxu0 0.0
    %278 = vmatpush1.msra.mxu0 %v79
    %279 = vmatprep.subr.mxu0 0.0
    %280 = vmatpush1.msra.mxu0 %v80
    %281 = vmatprep.subr.mxu0 0.0
    %282 = vmatpush1.msra.mxu0 %v81
    %283 = vmatprep.subr.mxu0 0.0
    %284 = vmatpush1.msra.mxu0 %v82
    %285 = vmatprep.subr.mxu0 0.0
    %286 = vmatpush1.msra.mxu0 %v83
    %287 = vmatprep.subr.mxu0 0.0
    %288 = vmatpush1.msra.mxu0 %v84
    %289 = vmatprep.subr.mxu0 0.0
    %290 = vmatpush1.msra.mxu0 %v85
    %291 = vmatprep.subr.mxu0 0.0
    %292 = vmatpush1.msra.mxu0 %v86
    %293 = vmatprep.subr.mxu0 0.0
    %294 = vmatpush1.msra.mxu0 %v87
    %295 = vmatprep.mubr.f32.mxu0 %v148
    %296 = vmatmul.mubr.f32.gmra.mrb[0].mxu0 %v147
    %v297 = vpop.f32.mrb[0].mxu0
    %v298 = vadd.f32 %v228, %v297
    %v299 = vpop.f32.mrb[0].mxu0
    %300 = vdwg.mxu0
    %301 = vmatprep.subr.mxu0 0.0
    %302 = vmatpush1.msra.mxu0 %v88
    %303 = vmatprep.subr.mxu0 0.0
    %304 = vmatpush1.msra.mxu0 %v89
    %305 = vmatprep.subr.mxu0 0.0
    %306 = vmatpush1.msra.mxu0 %v90
    %307 = vmatprep.subr.mxu0 0.0
    %308 = vmatpush1.msra.mxu0 %v91
    %309 = vmatprep.subr.mxu0 0.0
    %310 = vmatpush1.msra.mxu0 %v92
    %311 = vmatprep.subr.mxu0 0.0
    %312 = vmatpush1.msra.mxu0 %v93
    %313 = vmatprep.subr.mxu0 0.0
    %314 = vmatpush1.msra.mxu0 %v94
    %315 = vmatprep.subr.mxu0 0.0
    %316 = vmatpush1.msra.mxu0 %v95
    %317 = vmatprep.subr.mxu0 0.0
    %318 = vmatpush1.msra.mxu0 %v96
    %319 = vmatprep.subr.mxu0 0.0
    %320 = vmatpush1.msra.mxu0 %v97
    %321 = vmatprep.subr.mxu0 0.0
    %322 = vmatpush1.msra.mxu0 %v98
    %323 = vmatprep.subr.mxu0 0.0
    %324 = vmatpush1.msra.mxu0 %v99
    %325 = vmatprep.subr.mxu0 0.0
    %326 = vmatpush1.msra.mxu0 %v100
    %327 = vmatprep.subr.mxu0 0.0
    %328 = vmatpush1.msra.mxu0 %v101
    %329 = vmatprep.subr.mxu0 0.0
    %330 = vmatpush1.msra.mxu0 %v102
    %331 = vmatprep.subr.mxu0 0.0
    %332 = vmatpush1.msra.mxu0 %v103
    %333 = vmatprep.subr.mxu0 0.0
    %334 = vmatpush1.msra.mxu0 %v104
    %335 = vmatprep.subr.mxu0 0.0
    %336 = vmatpush1.msra.mxu0 %v105
    %337 = vmatprep.subr.mxu0 0.0
    %338 = vmatpush1.msra.mxu0 %v106
    %339 = vmatprep.subr.mxu0 0.0
    %340 = vmatpush1.msra.mxu0 %v107
    %341 = vmatprep.subr.mxu0 0.0
    %342 = vmatpush1.msra.mxu0 %v108
    %343 = vmatprep.subr.mxu0 0.0
    %344 = vmatpush1.msra.mxu0 %v109
    %345 = vmatprep.subr.mxu0 0.0
    %346 = vmatpush1.msra.mxu0 %v110
    %347 = vmatprep.subr.mxu0 0.0
    %348 = vmatpush1.msra.mxu0 %v111
    %349 = vmatprep.subr.mxu0 0.0
    %350 = vmatpush1.msra.mxu0 %v112
    %351 = vmatprep.subr.mxu0 0.0
    %352 = vmatpush1.msra.mxu0 %v113
    %353 = vmatprep.subr.mxu0 0.0
    %354 = vmatpush1.msra.mxu0 %v114
    %355 = vmatprep.subr.mxu0 0.0
    %356 = vmatpush1.msra.mxu0 %v115
    %357 = vmatprep.subr.mxu0 0.0
    %358 = vmatpush1.msra.mxu0 %v116
    %359 = vmatprep.subr.mxu0 0.0
    %360 = vmatpush1.msra.mxu0 %v117
    %361 = vmatprep.subr.mxu0 0.0
    %362 = vmatpush1.msra.mxu0 %v118
    %363 = vmatprep.subr.mxu0 0.0
    %364 = vmatpush1.msra.mxu0 %v119
    %365 = vmatprep.mubr.f32.mxu0 %v150
    %366 = vmatmul.mubr.f32.gmra.mrb[0].mxu0 %v149
    %v367 = vpop.f32.mrb[0].mxu0
    %v368 = vadd.f32 %v298, %v367
    %v369 = vpop.f32.mrb[0].mxu0
    %370 = vdwg.mxu0
    %371 = vmatprep.subr.mxu0 0.0
    %372 = vmatpush1.msra.mxu0 %v120
    %373 = vmatprep.subr.mxu0 0.0
    %374 = vmatpush1.msra.mxu0 %v121
    %375 = vmatprep.subr.mxu0 0.0
    %376 = vmatpush1.msra.mxu0 0.0
    %377 = vmatprep.subr.mxu0 0.0
    %378 = vmatpush1.msra.mxu0 0.0
    %379 = vmatprep.subr.mxu0 0.0
    %380 = vmatpush1.msra.mxu0 0.0
    %381 = vmatprep.subr.mxu0 0.0
    %382 = vmatpush1.msra.mxu0 0.0
    %383 = vmatprep.subr.mxu0 0.0
    %384 = vmatpush1.msra.mxu0 0.0
    %385 = vmatprep.subr.mxu0 0.0
    %386 = vmatpush1.msra.mxu0 0.0
    %387 = vmatprep.subr.mxu0 0.0
    %388 = vmatpush1.msra.mxu0 0.0
    %389 = vmatprep.subr.mxu0 0.0
    %390 = vmatpush1.msra.mxu0 0.0
    %391 = vmatprep.subr.mxu0 0.0
    %392 = vmatpush1.msra.mxu0 0.0
    %393 = vmatprep.subr.mxu0 0.0
    %394 = vmatpush1.msra.mxu0 0.0
    %395 = vmatprep.subr.mxu0 0.0
    %396 = vmatpush1.msra.mxu0 0.0
    %397 = vmatprep.subr.mxu0 0.0
    %398 = vmatpush1.msra.mxu0 0.0
    %399 = vmatprep.subr.mxu0 0.0
    %400 = vmatpush1.msra.mxu0 0.0
    %401 = vmatprep.subr.mxu0 0.0
    %402 = vmatpush1.msra.mxu0 0.0
    %403 = vmatprep.subr.mxu0 0.0
    %404 = vmatpush1.msra.mxu0 0.0
    %405 = vmatprep.subr.mxu0 0.0
    %406 = vmatpush1.msra.mxu0 0.0
    %407 = vmatprep.subr.mxu0 0.0
    %408 = vmatpush1.msra.mxu0 0.0
    %409 = vmatprep.subr.mxu0 0.0
    %410 = vmatpush1.msra.mxu0 0.0
    %411 = vmatprep.subr.mxu0 0.0
    %412 = vmatpush1.msra.mxu0 0.0
    %413 = vmatprep.subr.mxu0 0.0
    %414 = vmatpush1.msra.mxu0 0.0
    %415 = vmatprep.subr.mxu0 0.0
    %416 = vmatpush1.msra.mxu0 0.0
    %417 = vmatprep.subr.mxu0 0.0
    %418 = vmatpush1.msra.mxu0 0.0
    %419 = vmatprep.subr.mxu0 0.0
    %420 = vmatpush1.msra.mxu0 0.0
    %421 = vmatprep.subr.mxu0 0.0
    %422 = vmatpush1.msra.mxu0 0.0
    %423 = vmatprep.subr.mxu0 0.0
    %424 = vmatpush1.msra.mxu0 0.0
    %425 = vmatprep.subr.mxu0 0.0
    %426 = vmatpush1.msra.mxu0 0.0
    %427 = vmatprep.subr.mxu0 0.0
    %428 = vmatpush1.msra.mxu0 0.0
    %429 = vmatprep.subr.mxu0 0.0
    %430 = vmatpush1.msra.mxu0 0.0
    %431 = vmatprep.subr.mxu0 0.0
    %432 = vmatpush1.msra.mxu0 0.0
    %433 = vmatprep.subr.mxu0 0.0
    %434 = vmatpush1.msra.mxu0 0.0
    %435 = vmatprep.mubr.f32.mxu0 0.0
    %436 = vmatmul.mubr.f32.gmra.mrb[0].mxu0 %v159
    %v437 = vpop.f32.mrb[0].mxu0
    %v438 = vadd.f32 %v368, %v437
    %v439 = vpop.f32.mrb[0].mxu0
    %440 = vdwg.mxu0
    %v441 = vmax.f32 %v438, 0.0
    %v442 = vld [vmem:[%s1] sm:$0xff]
    %v443 = vld [vmem:[%s1 + $0x8] sm:$0xff]
    %v444 = vld [vmem:[%s1 + $0x10] sm:$0xff]
    %v445 = vld [vmem:[%s1 + $0x18] sm:$0xf]
    %v446 = vld [vmem:[%s1 + $0x1c] sm:$0xff]
    %v447 = vld [vmem:[%s1 + $0x24] sm:$0xff]
    %v448 = vld [vmem:[%s1 + $0x2c] sm:$0xff]
    %v449 = vld [vmem:[%s1 + $0x34] sm:$0xf]
    %v458 = vcombine.low %v442, %v446
    %v459 = vcombine.high %v442, %v446
    %v460 = vcombine.low %v443, %v447
    %v461 = vcombine.high %v443, %v447
    %v462 = vcombine.low %v444, %v448
    %v463 = vcombine.high %v444, %v448
    %v464 = vcombine.low %v445, %v449
    %v471 = vsel %vm158, %v464, 0
    %473 = vmatprep.subr.mxu0 0.0
    %474 = vmatpush1.msra.mxu0 %v24
    %475 = vmatprep.subr.mxu0 0.0
    %476 = vmatpush1.msra.mxu0 %v25
    %477 = vmatprep.subr.mxu0 0.0
    %478 = vmatpush1.msra.mxu0 %v26
    %479 = vmatprep.subr.mxu0 0.0
    %480 = vmatpush1.msra.mxu0 %v27
    %481 = vmatprep.subr.mxu0 0.0
    %482 = vmatpush1.msra.mxu0 %v28
    %483 = vmatprep.subr.mxu0 0.0
    %484 = vmatpush1.msra.mxu0 %v29
    %485 = vmatprep.subr.mxu0 0.0
    %486 = vmatpush1.msra.mxu0 %v30
    %487 = vmatprep.subr.mxu0 0.0
    %488 = vmatpush1.msra.mxu0 %v31
    %489 = vmatprep.subr.mxu0 0.0
    %490 = vmatpush1.msra.mxu0 %v32
    %491 = vmatprep.subr.mxu0 0.0
    %492 = vmatpush1.msra.mxu0 %v33
    %493 = vmatprep.subr.mxu0 0.0
    %494 = vmatpush1.msra.mxu0 %v34
    %495 = vmatprep.subr.mxu0 0.0
    %496 = vmatpush1.msra.mxu0 %v35
    %497 = vmatprep.subr.mxu0 0.0
    %498 = vmatpush1.msra.mxu0 %v36
    %499 = vmatprep.subr.mxu0 0.0
    %500 = vmatpush1.msra.mxu0 %v37
    %501 = vmatprep.subr.mxu0 0.0
    %502 = vmatpush1.msra.mxu0 %v38
    %503 = vmatprep.subr.mxu0 0.0
    %504 = vmatpush1.msra.mxu0 %v39
    %505 = vmatprep.subr.mxu0 0.0
    %506 = vmatpush1.msra.mxu0 %v40
    %507 = vmatprep.subr.mxu0 0.0
    %508 = vmatpush1.msra.mxu0 %v41
    %509 = vmatprep.subr.mxu0 0.0
    %510 = vmatpush1.msra.mxu0 %v42
    %511 = vmatprep.subr.mxu0 0.0
    %512 = vmatpush1.msra.mxu0 %v43
    %513 = vmatprep.subr.mxu0 0.0
    %514 = vmatpush1.msra.mxu0 %v44
    %515 = vmatprep.subr.mxu0 0.0
    %516 = vmatpush1.msra.mxu0 %v45
    %517 = vmatprep.subr.mxu0 0.0
    %518 = vmatpush1.msra.mxu0 %v46
    %519 = vmatprep.subr.mxu0 0.0
    %520 = vmatpush1.msra.mxu0 %v47
    %521 = vmatprep.subr.mxu0 0.0
    %522 = vmatpush1.msra.mxu0 %v48
    %523 = vmatprep.subr.mxu0 0.0
    %524 = vmatpush1.msra.mxu0 %v49
    %525 = vmatprep.subr.mxu0 0.0
    %526 = vmatpush1.msra.mxu0 %v50
    %527 = vmatprep.subr.mxu0 0.0
    %528 = vmatpush1.msra.mxu0 %v51
    %529 = vmatprep.subr.mxu0 0.0
    %530 = vmatpush1.msra.mxu0 %v52
    %531 = vmatprep.subr.mxu0 0.0
    %532 = vmatpush1.msra.mxu0 %v53
    %533 = vmatprep.subr.mxu0 0.0
    %534 = vmatpush1.msra.mxu0 %v54
    %535 = vmatprep.subr.mxu0 0.0
    %536 = vmatpush1.msra.mxu0 %v55
    %537 = vmatprep.mubr.f32.mxu0 %v459
    %538 = vmatmul.mubr.f32.gmra.mrb[0].mxu0 %v458
    %v539 = vpop.f32.mrb[0].mxu0
    %v540 = vadd.f32 %v135, %v539
    %v541 = vpop.f32.mrb[0].mxu0
    %542 = vdwg.mxu0
    %543 = vmatprep.subr.mxu0 0.0
    %544 = vmatpush1.msra.mxu0 %v56
    %545 = vmatprep.subr.mxu0 0.0
    %546 = vmatpush1.msra.mxu0 %v57
    %547 = vmatprep.subr.mxu0 0.0
    %548 = vmatpush1.msra.mxu0 %v58
    %549 = vmatprep.subr.mxu0 0.0
    %550 = vmatpush1.msra.mxu0 %v59
    %551 = vmatprep.subr.mxu0 0.0
    %552 = vmatpush1.msra.mxu0 %v60
    %553 = vmatprep.subr.mxu0 0.0
    %554 = vmatpush1.msra.mxu0 %v61
    %555 = vmatprep.subr.mxu0 0.0
    %556 = vmatpush1.msra.mxu0 %v62
    %557 = vmatprep.subr.mxu0 0.0
    %558 = vmatpush1.msra.mxu0 %v63
    %559 = vmatprep.subr.mxu0 0.0
    %560 = vmatpush1.msra.mxu0 %v64
    %561 = vmatprep.subr.mxu0 0.0
    %562 = vmatpush1.msra.mxu0 %v65
    %563 = vmatprep.subr.mxu0 0.0
    %564 = vmatpush1.msra.mxu0 %v66
    %565 = vmatprep.subr.mxu0 0.0
    %566 = vmatpush1.msra.mxu0 %v67
    %567 = vmatprep.subr.mxu0 0.0
    %568 = vmatpush1.msra.mxu0 %v68
    %569 = vmatprep.subr.mxu0 0.0
    %570 = vmatpush1.msra.mxu0 %v69
    %571 = vmatprep.subr.mxu0 0.0
    %572 = vmatpush1.msra.mxu0 %v70
    %573 = vmatprep.subr.mxu0 0.0
    %574 = vmatpush1.msra.mxu0 %v71
    %575 = vmatprep.subr.mxu0 0.0
    %576 = vmatpush1.msra.mxu0 %v72
    %577 = vmatprep.subr.mxu0 0.0
    %578 = vmatpush1.msra.mxu0 %v73
    %579 = vmatprep.subr.mxu0 0.0
    %580 = vmatpush1.msra.mxu0 %v74
    %581 = vmatprep.subr.mxu0 0.0
    %582 = vmatpush1.msra.mxu0 %v75
    %583 = vmatprep.subr.mxu0 0.0
    %584 = vmatpush1.msra.mxu0 %v76
    %585 = vmatprep.subr.mxu0 0.0
    %586 = vmatpush1.msra.mxu0 %v77
    %587 = vmatprep.subr.mxu0 0.0
    %588 = vmatpush1.msra.mxu0 %v78
    %589 = vmatprep.subr.mxu0 0.0
    %590 = vmatpush1.msra.mxu0 %v79
    %591 = vmatprep.subr.mxu0 0.0
    %592 = vmatpush1.msra.mxu0 %v80
    %593 = vmatprep.subr.mxu0 0.0
    %594 = vmatpush1.msra.mxu0 %v81
    %595 = vmatprep.subr.mxu0 0.0
    %596 = vmatpush1.msra.mxu0 %v82
    %597 = vmatprep.subr.mxu0 0.0
    %598 = vmatpush1.msra.mxu0 %v83
    %599 = vmatprep.subr.mxu0 0.0
    %600 = vmatpush1.msra.mxu0 %v84
    %601 = vmatprep.subr.mxu0 0.0
    %602 = vmatpush1.msra.mxu0 %v85
    %603 = vmatprep.subr.mxu0 0.0
    %604 = vmatpush1.msra.mxu0 %v86
    %605 = vmatprep.subr.mxu0 0.0
    %606 = vmatpush1.msra.mxu0 %v87
    %607 = vmatprep.mubr.f32.mxu0 %v461
    %608 = vmatmul.mubr.f32.gmra.mrb[0].mxu0 %v460
    %v609 = vpop.f32.mrb[0].mxu0
    %v610 = vadd.f32 %v540, %v609
    %v611 = vpop.f32.mrb[0].mxu0
    %612 = vdwg.mxu0
    %613 = vmatprep.subr.mxu0 0.0
    %614 = vmatpush1.msra.mxu0 %v88
    %615 = vmatprep.subr.mxu0 0.0
    %616 = vmatpush1.msra.mxu0 %v89
    %617 = vmatprep.subr.mxu0 0.0
    %618 = vmatpush1.msra.mxu0 %v90
    %619 = vmatprep.subr.mxu0 0.0
    %620 = vmatpush1.msra.mxu0 %v91
    %621 = vmatprep.subr.mxu0 0.0
    %622 = vmatpush1.msra.mxu0 %v92
    %623 = vmatprep.subr.mxu0 0.0
    %624 = vmatpush1.msra.mxu0 %v93
    %625 = vmatprep.subr.mxu0 0.0
    %626 = vmatpush1.msra.mxu0 %v94
    %627 = vmatprep.subr.mxu0 0.0
    %628 = vmatpush1.msra.mxu0 %v95
    %629 = vmatprep.subr.mxu0 0.0
    %630 = vmatpush1.msra.mxu0 %v96
    %631 = vmatprep.subr.mxu0 0.0
    %632 = vmatpush1.msra.mxu0 %v97
    %633 = vmatprep.subr.mxu0 0.0
    %634 = vmatpush1.msra.mxu0 %v98
    %635 = vmatprep.subr.mxu0 0.0
    %636 = vmatpush1.msra.mxu0 %v99
    %637 = vmatprep.subr.mxu0 0.0
    %638 = vmatpush1.msra.mxu0 %v100
    %639 = vmatprep.subr.mxu0 0.0
    %640 = vmatpush1.msra.mxu0 %v101
    %641 = vmatprep.subr.mxu0 0.0
    %642 = vmatpush1.msra.mxu0 %v102
    %643 = vmatprep.subr.mxu0 0.0
    %644 = vmatpush1.msra.mxu0 %v103
    %645 = vmatprep.subr.mxu0 0.0
    %646 = vmatpush1.msra.mxu0 %v104
    %647 = vmatprep.subr.mxu0 0.0
    %648 = vmatpush1.msra.mxu0 %v105
    %649 = vmatprep.subr.mxu0 0.0
    %650 = vmatpush1.msra.mxu0 %v106
    %651 = vmatprep.subr.mxu0 0.0
    %652 = vmatpush1.msra.mxu0 %v107
    %653 = vmatprep.subr.mxu0 0.0
    %654 = vmatpush1.msra.mxu0 %v108
    %655 = vmatprep.subr.mxu0 0.0
    %656 = vmatpush1.msra.mxu0 %v109
    %657 = vmatprep.subr.mxu0 0.0
    %658 = vmatpush1.msra.mxu0 %v110
    %659 = vmatprep.subr.mxu0 0.0
    %660 = vmatpush1.msra.mxu0 %v111
    %661 = vmatprep.subr.mxu0 0.0
    %662 = vmatpush1.msra.mxu0 %v112
    %663 = vmatprep.subr.mxu0 0.0
    %664 = vmatpush1.msra.mxu0 %v113
    %665 = vmatprep.subr.mxu0 0.0
    %666 = vmatpush1.msra.mxu0 %v114
    %667 = vmatprep.subr.mxu0 0.0
    %668 = vmatpush1.msra.mxu0 %v115
    %669 = vmatprep.subr.mxu0 0.0
    %670 = vmatpush1.msra.mxu0 %v116
    %671 = vmatprep.subr.mxu0 0.0
    %672 = vmatpush1.msra.mxu0 %v117
    %673 = vmatprep.subr.mxu0 0.0
    %674 = vmatpush1.msra.mxu0 %v118
    %675 = vmatprep.subr.mxu0 0.0
    %676 = vmatpush1.msra.mxu0 %v119
    %677 = vmatprep.mubr.f32.mxu0 %v463
    %678 = vmatmul.mubr.f32.gmra.mrb[0].mxu0 %v462
    %v679 = vpop.f32.mrb[0].mxu0
    %v680 = vadd.f32 %v610, %v679
    %v681 = vpop.f32.mrb[0].mxu0
    %682 = vdwg.mxu0
    %683 = vmatprep.subr.mxu0 0.0
    %684 = vmatpush1.msra.mxu0 %v120
    %685 = vmatprep.subr.mxu0 0.0
    %686 = vmatpush1.msra.mxu0 %v121
    %687 = vmatprep.subr.mxu0 0.0
    %688 = vmatpush1.msra.mxu0 0.0
    %689 = vmatprep.subr.mxu0 0.0
    %690 = vmatpush1.msra.mxu0 0.0
    %691 = vmatprep.subr.mxu0 0.0
    %692 = vmatpush1.msra.mxu0 0.0
    %693 = vmatprep.subr.mxu0 0.0
    %694 = vmatpush1.msra.mxu0 0.0
    %695 = vmatprep.subr.mxu0 0.0
    %696 = vmatpush1.msra.mxu0 0.0
    %697 = vmatprep.subr.mxu0 0.0
    %698 = vmatpush1.msra.mxu0 0.0
    %699 = vmatprep.subr.mxu0 0.0
    %700 = vmatpush1.msra.mxu0 0.0
    %701 = vmatprep.subr.mxu0 0.0
    %702 = vmatpush1.msra.mxu0 0.0
    %703 = vmatprep.subr.mxu0 0.0
    %704 = vmatpush1.msra.mxu0 0.0
    %705 = vmatprep.subr.mxu0 0.0
    %706 = vmatpush1.msra.mxu0 0.0
    %707 = vmatprep.subr.mxu0 0.0
    %708 = vmatpush1.msra.mxu0 0.0
    %709 = vmatprep.subr.mxu0 0.0
    %710 = vmatpush1.msra.mxu0 0.0
    %711 = vmatprep.subr.mxu0 0.0
    %712 = vmatpush1.msra.mxu0 0.0
    %713 = vmatprep.subr.mxu0 0.0
    %714 = vmatpush1.msra.mxu0 0.0
    %715 = vmatprep.subr.mxu0 0.0
    %716 = vmatpush1.msra.mxu0 0.0
    %717 = vmatprep.subr.mxu0 0.0
    %718 = vmatpush1.msra.mxu0 0.0
    %719 = vmatprep.subr.mxu0 0.0
    %720 = vmatpush1.msra.mxu0 0.0
    %721 = vmatprep.subr.mxu0 0.0
    %722 = vmatpush1.msra.mxu0 0.0
    %723 = vmatprep.subr.mxu0 0.0
    %724 = vmatpush1.msra.mxu0 0.0
    %725 = vmatprep.subr.mxu0 0.0
    %726 = vmatpush1.msra.mxu0 0.0
    %727 = vmatprep.subr.mxu0 0.0
    %728 = vmatpush1.msra.mxu0 0.0
    %729 = vmatprep.subr.mxu0 0.0
    %730 = vmatpush1.msra.mxu0 0.0
    %731 = vmatprep.subr.mxu0 0.0
    %732 = vmatpush1.msra.mxu0 0.0
    %733 = vmatprep.subr.mxu0 0.0
    %734 = vmatpush1.msra.mxu0 0.0
    %735 = vmatprep.subr.mxu0 0.0
    %736 = vmatpush1.msra.mxu0 0.0
    %737 = vmatprep.subr.mxu0 0.0
    %738 = vmatpush1.msra.mxu0 0.0
    %739 = vmatprep.subr.mxu0 0.0
    %740 = vmatpush1.msra.mxu0 0.0
    %741 = vmatprep.subr.mxu0 0.0
    %742 = vmatpush1.msra.mxu0 0.0
    %743 = vmatprep.subr.mxu0 0.0
    %744 = vmatpush1.msra.mxu0 0.0
    %745 = vmatprep.subr.mxu0 0.0
    %746 = vmatpush1.msra.mxu0 0.0
    %747 = vmatprep.mubr.f32.mxu0 0.0
    %748 = vmatmul.mubr.f32.gmra.mrb[0].mxu0 %v471
    %v749 = vpop.f32.mrb[0].mxu0
    %v750 = vadd.f32 %v680, %v749
    %v751 = vpop.f32.mrb[0].mxu0
    %752 = vdwg.mxu0
    %v753 = vmax.f32 %v750, 0.0
    %v754 = vld [vmem:[%s4] sm:$0xff]
    %v755 = vld [vmem:[%s4 + $0x8] sm:$0x3]
    %v756 = vld [vmem:[%s5] sm:$0xff]
    %v757 = vld [vmem:[%s5 + $0x8] sm:$0x3]
    %vm758 = vcmask 80896
    %v760 = vsel %vm758, %v753, 0
    %vm762 = vcmask 1041408
    %v764 = vsel %vm762, %v757, 0
    %766 = vmatprep.subr.mxu0 0.0
    %767 = vmatpush1.msra.mxu0 %v756
    %768 = vmatprep.subr.mxu0 0.0
    %769 = vmatpush1.msra.mxu0 %v764
    %770 = vmatprep.subr.mxu0 0.0
    %771 = vmatpush1.msra.mxu0 0.0
    %772 = vmatprep.subr.mxu0 0.0
    %773 = vmatpush1.msra.mxu0 0.0
    %774 = vmatprep.subr.mxu0 0.0
    %775 = vmatpush1.msra.mxu0 0.0
    %776 = vmatprep.subr.mxu0 0.0
    %777 = vmatpush1.msra.mxu0 0.0
    %778 = vmatprep.subr.mxu0 0.0
    %779 = vmatpush1.msra.mxu0 0.0
    %780 = vmatprep.subr.mxu0 0.0
    %781 = vmatpush1.msra.mxu0 0.0
    %782 = vmatprep.subr.mxu0 0.0
    %783 = vmatpush1.msra.mxu0 0.0
    %784 = vmatprep.subr.mxu0 0.0
    %785 = vmatpush1.msra.mxu0 0.0
    %786 = vmatprep.subr.mxu0 0.0
    %787 = vmatpush1.msra.mxu0 0.0
    %788 = vmatprep.subr.mxu0 0.0
    %789 = vmatpush1.msra.mxu0 0.0
    %790 = vmatprep.subr.mxu0 0.0
    %791 = vmatpush1.msra.mxu0 0.0
    %792 = vmatprep.subr.mxu0 0.0
    %793 = vmatpush1.msra.mxu0 0.0
    %794 = vmatprep.subr.mxu0 0.0
    %795 = vmatpush1.msra.mxu0 0.0
    %796 = vmatprep.subr.mxu0 0.0
    %797 = vmatpush1.msra.mxu0 0.0
    %798 = vmatprep.subr.mxu0 0.0
    %799 = vmatpush1.msra.mxu0 0.0
    %800 = vmatprep.subr.mxu0 0.0
    %801 = vmatpush1.msra.mxu0 0.0
    %802 = vmatprep.subr.mxu0 0.0
    %803 = vmatpush1.msra.mxu0 0.0
    %804 = vmatprep.subr.mxu0 0.0
    %805 = vmatpush1.msra.mxu0 0.0
    %806 = vmatprep.subr.mxu0 0.0
    %807 = vmatpush1.msra.mxu0 0.0
    %808 = vmatprep.subr.mxu0 0.0
    %809 = vmatpush1.msra.mxu0 0.0
    %810 = vmatprep.subr.mxu0 0.0
    %811 = vmatpush1.msra.mxu0 0.0
    %812 = vmatprep.subr.mxu0 0.0
    %813 = vmatpush1.msra.mxu0 0.0
    %814 = vmatprep.subr.mxu0 0.0
    %815 = vmatpush1.msra.mxu0 0.0
    %816 = vmatprep.subr.mxu0 0.0
    %817 = vmatpush1.msra.mxu0 0.0
    %818 = vmatprep.subr.mxu0 0.0
    %819 = vmatpush1.msra.mxu0 0.0
    %820 = vmatprep.subr.mxu0 0.0
    %821 = vmatpush1.msra.mxu0 0.0
    %822 = vmatprep.subr.mxu0 0.0
    %823 = vmatpush1.msra.mxu0 0.0
    %824 = vmatprep.subr.mxu0 0.0
    %825 = vmatpush1.msra.mxu0 0.0
    %826 = vmatprep.subr.mxu0 0.0
    %827 = vmatpush1.msra.mxu0 0.0
    %828 = vmatprep.subr.mxu0 0.0
    %829 = vmatpush1.msra.mxu0 0.0
    %830 = vmatprep.mubr.f32.mxu0 0.0
    %831 = vmatmul.mubr.f32.gmra.mrb[0].mxu0 %v760
    %v832 = vpop.f32.mrb[0].mxu0
    %v833 = vadd.f32 0.0, %v832
    %v834 = vpop.f32.mrb[0].mxu0
    %835 = vdwg.mxu0
    %v837 = vsel %vm758, %v441, 0
    %v840 = vsel %vm762, %v755, 0
    %842 = vmatprep.subr.mxu0 0.0
    %843 = vmatpush1.msra.mxu0 %v754
    %844 = vmatprep.subr.mxu0 0.0
    %845 = vmatpush1.msra.mxu0 %v840
    %846 = vmatprep.subr.mxu0 0.0
    %847 = vmatpush1.msra.mxu0 0.0
    %848 = vmatprep.subr.mxu0 0.0
    %849 = vmatpush1.msra.mxu0 0.0
    %850 = vmatprep.subr.mxu0 0.0
    %851 = vmatpush1.msra.mxu0 0.0
    %852 = vmatprep.subr.mxu0 0.0
    %853 = vmatpush1.msra.mxu0 0.0
    %854 = vmatprep.subr.mxu0 0.0
    %855 = vmatpush1.msra.mxu0 0.0
    %856 = vmatprep.subr.mxu0 0.0
    %857 = vmatpush1.msra.mxu0 0.0
    %858 = vmatprep.subr.mxu0 0.0
    %859 = vmatpush1.msra.mxu0 0.0
    %860 = vmatprep.subr.mxu0 0.0
    %861 = vmatpush1.msra.mxu0 0.0
    %862 = vmatprep.subr.mxu0 0.0
    %863 = vmatpush1.msra.mxu0 0.0
    %864 = vmatprep.subr.mxu0 0.0
    %865 = vmatpush1.msra.mxu0 0.0
    %866 = vmatprep.subr.mxu0 0.0
    %867 = vmatpush1.msra.mxu0 0.0
    %868 = vmatprep.subr.mxu0 0.0
    %869 = vmatpush1.msra.mxu0 0.0
    %870 = vmatprep.subr.mxu0 0.0
    %871 = vmatpush1.msra.mxu0 0.0
    %872 = vmatprep.subr.mxu0 0.0
    %873 = vmatpush1.msra.mxu0 0.0
    %874 = vmatprep.subr.mxu0 0.0
    %875 = vmatpush1.msra.mxu0 0.0
    %876 = vmatprep.subr.mxu0 0.0
    %877 = vmatpush1.msra.mxu0 0.0
    %878 = vmatprep.subr.mxu0 0.0
    %879 = vmatpush1.msra.mxu0 0.0
    %880 = vmatprep.subr.mxu0 0.0
    %881 = vmatpush1.msra.mxu0 0.0
    %882 = vmatprep.subr.mxu0 0.0
    %883 = vmatpush1.msra.mxu0 0.0
    %884 = vmatprep.subr.mxu0 0.0
    %885 = vmatpush1.msra.mxu0 0.0
    %886 = vmatprep.subr.mxu0 0.0
    %887 = vmatpush1.msra.mxu0 0.0
    %888 = vmatprep.subr.mxu0 0.0
    %889 = vmatpush1.msra.mxu0 0.0
    %890 = vmatprep.subr.mxu0 0.0
    %891 = vmatpush1.msra.mxu0 0.0
    %892 = vmatprep.subr.mxu0 0.0
    %893 = vmatpush1.msra.mxu0 0.0
    %894 = vmatprep.subr.mxu0 0.0
    %895 = vmatpush1.msra.mxu0 0.0
    %896 = vmatprep.subr.mxu0 0.0
    %897 = vmatpush1.msra.mxu0 0.0
    %898 = vmatprep.subr.mxu0 0.0
    %899 = vmatpush1.msra.mxu0 0.0
    %900 = vmatprep.subr.mxu0 0.0
    %901 = vmatpush1.msra.mxu0 0.0
    %902 = vmatprep.subr.mxu0 0.0
    %903 = vmatpush1.msra.mxu0 0.0
    %904 = vmatprep.subr.mxu0 0.0
    %905 = vmatpush1.msra.mxu0 0.0
    %906 = vmatprep.mubr.f32.mxu0 0.0
    %907 = vmatmul.mubr.f32.gmra.mrb[0].mxu0 %v837
    %v908 = vpop.f32.mrb[0].mxu0
    %v909 = vadd.f32 %v833, %v908
    %v910 = vpop.f32.mrb[0].mxu0
    %911 = vdwg.mxu0
    %vm912 = vcmask 154624
    %913 = vst.msk [vmem:[#allocation2] sm:$0xff] %vm912, %v909
    // Predicated region
    $region26: #{tpu_custom_call.1} parent=1 // pred_check
      _
    $region27: #{tpu_custom_call.1} parent=1 // pred_check_branch
      %915 = sbr.rel (0) target = $region29
    $region28: #{tpu_custom_call.1} parent=1 // pred_region
      %s917 = ssub.s32 128, 64
      %918 = vsyncadd [#allocation3], %s917
      %s919 = sshll.u32 [#allocation2], 4
      %s920 = int_to_ptr.vmem [resolvable:$true] %s919
      %925 = dma.vmem_to_hbm [thread:$0]  %s920, 64, %s6, [#allocation3], 64, 64, 4
    $region29: #{tpu_custom_call.1} parent=1 // pred_fallthru
      _
    // Predicated region
    $region30: #{tpu_custom_call.1} parent=1 // pred_check
      _
    $region31: #{tpu_custom_call.1} parent=1 // pred_check_branch
      %927 = sbr.rel (0) target = $region33
    $region32: #{tpu_custom_call.1} parent=1 // pred_region
      %928 = dma.done [#allocation3], 128
    $region33: #{tpu_custom_call.1} parent=1 // pred_fallthru
      _
    %929 = vsyncpa [#allocation3], 1

</llo_original>
